<compile_context>
chip_gen: v6e
topology: v6e:2x2x1
jax: 0.10.0
libtpu: 0.0.40
codegen_flags: <defaults>
</compile_context>

<pallas_src>
import functools
import math

import jax
import jax.numpy as jnp
import numpy as np
from jax.experimental import pallas as pl
from jax.experimental.pallas import tpu as pltpu


def _pe_dropout_kernel(seed_ref, x_ref, pe_ref, o_ref, *, p: float,
                       training: bool, batch: int):
    # x_ref/o_ref: (TS, B*D); pe_ref: (TS, D); seed_ref: SMEM int32[1].
    x = x_ref[...].astype(jnp.float32)
    pe = pe_ref[...].astype(jnp.float32)

    # Broadcast PE over the folded batch axis along lanes (in VMEM, per tile).
    if batch > 1:
        pe_row = jnp.tile(pe, (1, batch))          # (TS, B*D)
    else:
        pe_row = pe
    y = x + pe_row

    if training and p > 0.0:
        ts, w = x_ref.shape
        # Global element id -> hashed uint32 -> Bernoulli(1-p) keep mask.
        g_off = pl.program_id(0) * ts              # row offset of this tile
        row = jax.lax.broadcasted_iota(jnp.int32, (ts, w), 0) + g_off
        col = jax.lax.broadcasted_iota(jnp.int32, (ts, w), 1)
        lin = row.astype(jnp.uint32) * jnp.uint32(w) + col.astype(jnp.uint32)

        seed_u = seed_ref[0].astype(jnp.uint32)
        h = lin + seed_u * jnp.uint32(0x9E3779B9)
        # splitmix/lowbias32-style mixer (plain VPU integer ops).
        h = h ^ (h >> 16)
        h = h * jnp.uint32(0x7FEB352D)
        h = h ^ (h >> 15)
        h = h * jnp.uint32(0x846CA68B)
        h = h ^ (h >> 16)

        # Integer-threshold compare: drop iff h < p * 2^32.
        threshold = jnp.uint32(min(int(round(p * 4294967296.0)), 4294967295))
        keep = h >= threshold
        y = jnp.where(keep, y * jnp.float32(1.0 / (1.0 - p)), jnp.float32(0.0))

    o_ref[...] = y.astype(o_ref.dtype)


def make_positional_encoding_table(d_model: int, max_len: int = 5000) -> jnp.ndarray:
    """Deterministic sinusoidal table, identical to the PyTorch __init__."""
    position = np.arange(max_len, dtype=np.float32)[:, None]                 # (max_len, 1)
    div_term = np.exp(np.arange(0, d_model, 2, dtype=np.float32)
                      * (-math.log(10000.0) / d_model))                       # (d_model/2,)
    pe = np.zeros((max_len, 1, d_model), dtype=np.float32)
    pe[:, 0, 0::2] = np.sin(position * div_term)
    pe[:, 0, 1::2] = np.cos(position * div_term)
    return jnp.asarray(pe)


def positional_encoding_forward(x: jnp.ndarray,
                                pe: jnp.ndarray,
                                seed: jnp.ndarray,
                                *,
                                p: float = 0.1,
                                training: bool = True,
                                block_bytes: int = 2 * 1024 * 1024) -> jnp.ndarray:
    """x: (S, B, D); pe: (max_len, 1, D) float32; seed: int32[1]."""
    S, B, D = x.shape
    W = B * D

    # Lane-dense folding: (S, B, D) -> (S, B*D).  PE stays (S, D) in HBM.
    x2 = x.reshape(S, W)
    pe2 = pe[:S, 0, :]

    # Tile the S axis: biggest block that keeps each x/out block ~block_bytes.
    itemsize = jnp.dtype(x.dtype).itemsize
    rows = max(8, block_bytes // max(1, W * itemsize))
    rows = (rows // 8) * 8                       # sublane-aligned tile height
    TS = S if S <= rows else rows                # multiple of 8, or the full S
    grid = (pl.cdiv(S, TS),)

    kernel = functools.partial(_pe_dropout_kernel, p=float(p),
                               training=bool(training), batch=B)

    y2 = pl.pallas_call(
        kernel,
        out_shape=jax.ShapeDtypeStruct((S, W), x.dtype),
        grid_spec=pltpu.PrefetchScalarGridSpec(
            num_scalar_prefetch=1,               # seed lands in SMEM
            grid=grid,
            in_specs=[
                pl.BlockSpec((TS, W), lambda i, seed: (i, 0)),
                pl.BlockSpec((TS, D), lambda i, seed: (i, 0)),
            ],
            out_specs=pl.BlockSpec((TS, W), lambda i, seed: (i, 0)),
        ),
        compiler_params=pltpu.CompilerParams(
            dimension_semantics=("parallel",),
            vmem_limit_bytes=32 * 1024 * 1024,
        ),
    )(seed, x2, pe2)

    return y2.reshape(S, B, D)


if __name__ == "__main__":
    # Small shapes consistent with the module's forward: [seq_len, batch, d_model]
    seq_len, batch, d_model = 8, 2, 32
    max_len = 64
    dropout_p = 0.1

    key = jax.random.PRNGKey(0)
    x = jax.random.normal(key, (seq_len, batch, d_model), dtype=jnp.float32)

    pe = make_positional_encoding_table(d_model, max_len)
    seed = jnp.array([12345], dtype=jnp.int32)

    # Eval-mode path (dropout = identity): verify exact semantics x + pe[:S].
    y_eval = positional_encoding_forward(x, pe, seed, p=dropout_p, training=False)
    y_eval = jax.block_until_ready(y_eval)
    expected = np.asarray(x) + np.asarray(pe[:seq_len])   # broadcast over batch
    np.testing.assert_allclose(np.asarray(y_eval), expected, rtol=1e-6, atol=1e-6)

    # Training-mode path (inverted dropout inside the kernel).
    y_train = positional_encoding_forward(x, pe, seed, p=dropout_p, training=True)
    y_train = jax.block_until_ready(y_train)
    assert y_train.shape == (seq_len, batch, d_model)
    scaled = expected / (1.0 - dropout_p)
    yt = np.asarray(y_train)
    ok = np.isclose(yt, scaled, rtol=1e-5, atol=1e-5) | np.isclose(yt, 0.0, atol=1e-7)
    assert ok.all()

    print("KERNEL_OK")
</pallas_src>

<mosaic_0001>
module attributes {stable_mosaic.version = 11 : i64} {
  func.func @_pe_dropout_kernel(%arg0: i32, %arg1: memref<1xi32, #tpu.memory_space<smem>>, %arg2: memref<8x64xf32, #tpu.memory_space<vmem>>, %arg3: memref<8x32xf32, #tpu.memory_space<vmem>>, %arg4: memref<8x64xf32, #tpu.memory_space<vmem>>) attributes {dimension_semantics = [#tpu.dimension_semantics<parallel>], iteration_bounds = array<i64: 1>, scalar_prefetch = 1 : i64, scratch_operands = 0 : i64, tpu.core_type = #tpu.core_type<tc>, window_params = [{transform_indices = @transform_0, window_bounds = array<i64: 8, 64>}, {transform_indices = @transform_1, window_bounds = array<i64: 8, 32>}, {transform_indices = @transform_2, window_bounds = array<i64: 8, 64>}]} {
    %c0 = arith.constant 0 : index
    %c0_0 = arith.constant 0 : index
    %0 = vector.load %arg2[%c0, %c0_0] : memref<8x64xf32, #tpu.memory_space<vmem>>, vector<8x64xf32>
    %c0_1 = arith.constant 0 : index
    %c0_2 = arith.constant 0 : index
    %1 = vector.load %arg3[%c0_1, %c0_2] : memref<8x32xf32, #tpu.memory_space<vmem>>, vector<8x32xf32>
    %2 = tpu.concatenate %1, %1 in 1 : vector<8x32xf32>, vector<8x32xf32> -> vector<8x64xf32>
    %3 = arith.addf %0, %2 : vector<8x64xf32>
    %c0_3 = arith.constant 0 : index
    %c0_4 = arith.constant 0 : index
    %4 = vector.load %arg4[%c0_3, %c0_4] : memref<8x64xf32, #tpu.memory_space<vmem>>, vector<8x64xf32>
    tpu.vector_store %arg4[%c0_3, %c0_4], %3 {strides = array<i32>} : memref<8x64xf32, #tpu.memory_space<vmem>>, vector<8x64xf32>,
    return
  }
  func.func @transform_0(%arg0: i32, %arg1: memref<1xi32, #tpu.memory_space<smem>>) -> (i32, i32) {
    %c0_i32 = arith.constant 0 : i32
    %c0_i32_0 = arith.constant 0 : i32
    return %arg0, %c0_i32 : i32, i32
  }
  func.func @transform_1(%arg0: i32, %arg1: memref<1xi32, #tpu.memory_space<smem>>) -> (i32, i32) {
    %c0_i32 = arith.constant 0 : i32
    %c0_i32_0 = arith.constant 0 : i32
    return %arg0, %c0_i32 : i32, i32
  }
  func.func @transform_2(%arg0: i32, %arg1: memref<1xi32, #tpu.memory_space<smem>>) -> (i32, i32) {
    %c0_i32 = arith.constant 0 : i32
    %c0_i32_0 = arith.constant 0 : i32
    return %arg0, %c0_i32 : i32, i32
  }
}

</mosaic_0001>

<llo_original>
// kernel: tpu_custom_call.1
$region0: #{tpu_custom_call.1}
  #allocation0 [shape = 'u32[]', space=smem, size = 0x4, offset = 0x4, fixed_abs, tag = 'smem constant byte address 0x4 - core index']
  #allocation1 [shape = 'u32[144,128]{1,0:T(1,128)}', space=vmem, size = 0x12000, scoped, tag = 'internal scratch']
  #allocation2 [shape = 's32[1]{0}', space=sflag, size = 0x4, scoped, tag = 'scoped memory for tpu_custom_call.1']
  #allocation3 [shape = 's32[1]{0:T(128)S(6)}', space=smem, size = 0x200, scoped, tag = 'prefetched SMEM operand 0']
  %s0 = inlined_call_operand.<no memory space> [shape: s32[1], index: 0, kind: input, shape index: {}]
  %s1 = inlined_call_operand.hbm [shape: f32[8,64], index: 1, kind: input, shape index: {}]
  %s2 = inlined_call_operand.hbm [shape: f32[8,32], index: 2, kind: input, shape index: {}]
  %s3 = inlined_call_operand.hbm [shape: f32[8,64], index: 3, kind: output, shape index: {}]
  %s4 = sld [smem:[#allocation0]]
  $region26: #{tpu_custom_call.1} parent=0
    _
  %s6 = ssub.s32 1, %s4
  %s7 = scalar_select 0, %s6, %s4
  %8 = sst [smem:[#allocation3]] %s0
  $region1: #{tpu_custom_call.1} parent=0
    #allocation4 [shape = 'u8[4096]{0}', space=vmem, size = 0x1000, scoped, tag = 'input window, operand 1, single buffered']
    #allocation5 [shape = 's32[1]{0}', space=sflag, size = 0x4, scoped, tag = 'scoped memory for tpu_custom_call.1']
    #allocation6 [shape = 's32[1]{0}', space=sflag, size = 0x4, scoped, tag = 'scoped memory for tpu_custom_call.1']
    #allocation7 [shape = 'u8[4096]{0}', space=vmem, size = 0x1000, scoped, tag = 'input window, operand 2, single buffered']
    #allocation8 [shape = 's32[1]{0}', space=sflag, size = 0x4, scoped, tag = 'scoped memory for tpu_custom_call.1']
    #allocation9 [shape = 'u8[4096]{0}', space=vmem, size = 0x1000, scoped, tag = 'output window, operand 0, single buffered']
    %9 = vsyncpa [#allocation5], 0
    %10 = vsyncpa [#allocation8], 0
    %11 = vsyncpa [#allocation6], 0
    // Predicated region
    $region2: #{tpu_custom_call.1} parent=1 // pred_check
      _
    $region3: #{tpu_custom_call.1} parent=1 // pred_check_branch
      %13 = sbr.rel (0) target = $region5
    $region4: #{tpu_custom_call.1} parent=1 // pred_region
      %s15 = ssub.s32 128, 128
      %16 = vsyncadd [#allocation5], %s15
      %s18 = sshll.u32 [#allocation4], 4
      %s19 = int_to_ptr.vmem [resolvable:$true] %s18
      %21 = dma.hbm_to_vmem [thread:$0]  %s1, 128, %s19, [#allocation5]
    $region5: #{tpu_custom_call.1} parent=1 // pred_fallthru
      _
    // Predicated region
    $region6: #{tpu_custom_call.1} parent=1 // pred_check
      _
    $region7: #{tpu_custom_call.1} parent=1 // pred_check_branch
      %23 = sbr.rel (0) target = $region9
    $region8: #{tpu_custom_call.1} parent=1 // pred_region
      %s25 = ssub.s32 128, 128
      %26 = vsyncadd [#allocation8], %s25
      %s28 = sshll.u32 [#allocation7], 4
      %s29 = int_to_ptr.vmem [resolvable:$true] %s28
      %31 = dma.hbm_to_vmem [thread:$0]  %s2, 128, %s29, [#allocation8]
    $region9: #{tpu_custom_call.1} parent=1 // pred_fallthru
      _
    // Predicated region
    $region10: #{tpu_custom_call.1} parent=1 // pred_check
      _
    $region11: #{tpu_custom_call.1} parent=1 // pred_check_branch
      %33 = sbr.rel (0) target = $region13
    $region12: #{tpu_custom_call.1} parent=1 // pred_region
      %34 = dma.done [#allocation5], 128
    $region13: #{tpu_custom_call.1} parent=1 // pred_fallthru
      _
    // Predicated region
    $region14: #{tpu_custom_call.1} parent=1 // pred_check
      _
    $region15: #{tpu_custom_call.1} parent=1 // pred_check_branch
      %36 = sbr.rel (0) target = $region17
    $region16: #{tpu_custom_call.1} parent=1 // pred_region
      %37 = dma.done [#allocation8], 128
    $region17: #{tpu_custom_call.1} parent=1 // pred_fallthru
      _
    %v38 = vld [vmem:[#allocation4] sm:$0xff]
    %v39 = vld [vmem:[#allocation7] sm:$0xff]
    %41 = vrot.lane.b32.xlu0 %v39, 32
    %v42 = vpop.permute.xlu0 %41
    %vm44 = vcmask 261120
    %v45 = vsel %vm44, %v39, %v42
    %v46 = vadd.f32 %v38, %v45
    %vm47 = vcmask 523264
    %48 = vst.msk [vmem:[#allocation9] sm:$0xff] %vm47, %v46
    // Predicated region
    $region18: #{tpu_custom_call.1} parent=1 // pred_check
      _
    $region19: #{tpu_custom_call.1} parent=1 // pred_check_branch
      %50 = sbr.rel (0) target = $region21
    $region20: #{tpu_custom_call.1} parent=1 // pred_region
      %s52 = ssub.s32 128, 128
      %53 = vsyncadd [#allocation6], %s52
      %s55 = sshll.u32 [#allocation9], 4
      %s56 = int_to_ptr.vmem [resolvable:$true] %s55
      %58 = dma.vmem_to_hbm [thread:$0]  %s56, 128, %s3, [#allocation6]
    $region21: #{tpu_custom_call.1} parent=1 // pred_fallthru
      _
    // Predicated region
    $region22: #{tpu_custom_call.1} parent=1 // pred_check
      _
    $region23: #{tpu_custom_call.1} parent=1 // pred_check_branch
      %60 = sbr.rel (0) target = $region25
    $region24: #{tpu_custom_call.1} parent=1 // pred_region
      %61 = dma.done [#allocation6], 128
    $region25: #{tpu_custom_call.1} parent=1 // pred_fallthru
      _
    %62 = vsyncpa [#allocation5], 1
    %63 = vsyncpa [#allocation8], 1
    %64 = vsyncpa [#allocation6], 1

</llo_original>
